<compile_context>
chip_gen: v5e
topology: v5e:2x2
jax: 0.10.0
libtpu: 0.0.40
codegen_flags: <defaults>
</compile_context>

<pallas_src>
import functools

import jax
import jax.numpy as jnp
from jax.experimental import pallas as pl
from jax.experimental.pallas import tpu as pltpu

LANES = 128
SUBLANES = 8


def _elementwise_focal(x, y, gamma, alpha):
    """Per-element focal BCE-with-logits loss in float32 (VPU/EUP-only ops)."""
    x = x.astype(jnp.float32)
    y = y.astype(jnp.float32)
    # exp(-|x|) shared by the stable BCE log-term and the sigmoid.
    e = jnp.exp(-jnp.abs(x))                                   # EUP 1
    log_term = jnp.log(1.0 + e)                                # EUP 2
    bce = jnp.maximum(x, 0.0) - x * y + log_term
    inv = 1.0 / (1.0 + e)                                      # EUP 3
    p = jnp.where(x >= 0.0, inv, e * inv)                      # sigmoid(x)
    # 1 - p_t = y*(1-p) + (1-y)*p  (always >= 0 for y in [0,1])
    one_minus_pt = y + p - 2.0 * y * p
    # y*alpha + (1-y)*(1-alpha) == (1-alpha) + y*(2*alpha - 1)
    alpha_factor = (1.0 - alpha) + y * (2.0 * alpha - 1.0)
    # (1 - p_t)**gamma, trace-time specialized on gamma.
    if gamma == 0.0:
        modulating = jnp.ones_like(one_minus_pt)
    elif gamma == 1.0:
        modulating = one_minus_pt
    elif gamma == 1.5:                                         # default
        modulating = one_minus_pt * jnp.sqrt(one_minus_pt)     # EUP 4
    elif gamma == 2.0:
        modulating = one_minus_pt * one_minus_pt
    else:
        # exp(gamma*log(t)); t==0 -> exp(-inf) == 0, correct for gamma > 0.
        modulating = jnp.exp(gamma * jnp.log(one_minus_pt))
    return bce * alpha_factor * modulating


def _focal_sum_kernel(p_ref, t_ref, o_ref, acc_ref, *,
                      numel, tm, tiles_per_core, gamma, alpha):
    """Accumulates the focal-loss sum for one core's row tiles."""
    c = pl.program_id(0)          # core split axis ("parallel")
    j = pl.program_id(1)          # row-tile axis   ("arbitrary", carried acc)

    @pl.when(j == 0)
    def _():
        acc_ref[...] = jnp.zeros_like(acc_ref)

    loss = _elementwise_focal(p_ref[...], t_ref[...], gamma, alpha)

    tile_idx = c * tiles_per_core + j            # logical (un-clamped) tile
    elem0 = tile_idx * (tm * LANES)
    # True only for the tile holding the element-count boundary and for the
    # fully-overflowed duplicate tiles produced by the clamped split axis.
    needs_mask = elem0 + tm * LANES > numel

    @pl.when(jnp.logical_not(needs_mask))
    def _():
        # Interior tile: pure VPU accumulate, no mask work.
        acc_ref[...] += jnp.sum(
            loss.reshape(tm // SUBLANES, SUBLANES, LANES), axis=0)

    @pl.when(needs_mask)
    def _():
        rows = jax.lax.broadcasted_iota(jnp.int32, (tm, LANES), 0) + tile_idx * tm
        lanes = jax.lax.broadcasted_iota(jnp.int32, (tm, LANES), 1)
        valid = rows * LANES + lanes < numel
        masked = jnp.where(valid, loss, 0.0)
        acc_ref[...] += jnp.sum(
            masked.reshape(tm // SUBLANES, SUBLANES, LANES), axis=0)

    @pl.when(j == pl.num_programs(1) - 1)
    def _():
        # One-time cross-lane/sublane reduce to this core's (1,1) partial.
        o_ref[...] = jnp.sum(acc_ref[...], keepdims=True)


def _focal_map_kernel(p_ref, t_ref, o_ref, *, gamma, alpha):
    """Elementwise focal loss (reduction='none')."""
    o_ref[...] = _elementwise_focal(
        p_ref[...], t_ref[...], gamma, alpha).astype(o_ref.dtype)


def _as_lane_slab(x):
    """Flatten to a lane-dense (rows, 128) view with rows % 8 == 0.

    When numel is already a multiple of 8*128 (typical feature/logit maps)
    this is a free reshape -- no HBM copy, no dtype cast.
    """
    numel = x.size
    flat = x.reshape(-1)
    chunk = SUBLANES * LANES
    rem = numel % chunk
    if rem:
        # TODO(synk): this minimal pad still materializes one HBM copy for
        # unaligned inputs; a plain-JAX tail would avoid it entirely.
        flat = jnp.pad(flat, (0, chunk - rem))
    rows = flat.size // LANES
    return flat.reshape(rows, LANES), rows, numel


def focal_loss(pred, true, gamma=1.5, alpha=0.25, reduction="mean", *,
               tm=1024, n_cores=2):
    """Pallas equivalent of FocalLoss(nn.BCEWithLogitsLoss(reduction)).forward."""
    assert pred.shape == true.shape
    p2, rows, numel = _as_lane_slab(pred)
    t2, _, _ = _as_lane_slab(true)

    # Biggest tile that fits the data; multiple of 8 sublanes, never > rows.
    tm_eff = max(SUBLANES, (min(tm, rows) // SUBLANES) * SUBLANES)
    num_tiles = pl.cdiv(rows, tm_eff)

    if reduction == "none":
        out = pl.pallas_call(
            functools.partial(_focal_map_kernel, gamma=gamma, alpha=alpha),
            out_shape=jax.ShapeDtypeStruct((rows, LANES), pred.dtype),
            grid_spec=pltpu.PrefetchScalarGridSpec(
                num_scalar_prefetch=0,
                grid=(num_tiles,),
                in_specs=[pl.BlockSpec((tm_eff, LANES), lambda i: (i, 0)),
                          pl.BlockSpec((tm_eff, LANES), lambda i: (i, 0))],
                out_specs=pl.BlockSpec((tm_eff, LANES), lambda i: (i, 0)),
            ),
            compiler_params=pltpu.CompilerParams(
                dimension_semantics=("parallel",)),
        )(p2, t2)
        return out.reshape(-1)[:numel].reshape(pred.shape)

    if reduction not in ("mean", "sum"):
        raise ValueError(f"unknown reduction: {reduction}")

    # 'mean' / 'sum': per-core partial sums (megacore-safe), reduced outside.
    n_split = n_cores if num_tiles >= 2 else 1
    tiles_per_core = pl.cdiv(num_tiles, n_split)

    def in_map(c, j):
        # Clamp so DMAs stay in bounds; overflow tiles are fully masked
        # inside the kernel (they use the un-clamped logical index).
        return (jnp.minimum(c * tiles_per_core + j, num_tiles - 1), 0)

    partials = pl.pallas_call(
        functools.partial(_focal_sum_kernel, numel=numel, tm=tm_eff,
                          tiles_per_core=tiles_per_core,
                          gamma=gamma, alpha=alpha),
        out_shape=jax.ShapeDtypeStruct((n_split, 1), jnp.float32),
        grid_spec=pltpu.PrefetchScalarGridSpec(
            num_scalar_prefetch=0,
            grid=(n_split, tiles_per_core),
            in_specs=[pl.BlockSpec((tm_eff, LANES), in_map),
                      pl.BlockSpec((tm_eff, LANES), in_map)],
            out_specs=pl.BlockSpec((1, 1), lambda c, j: (c, 0)),
            scratch_shapes=[pltpu.VMEM((SUBLANES, LANES), jnp.float32)],
        ),
        compiler_params=pltpu.CompilerParams(
            dimension_semantics=("parallel", "arbitrary")),
    )(p2, t2)

    total = jnp.sum(partials)
    if reduction == "mean":
        return total / jnp.float32(numel)
    return total


if __name__ == "__main__":
    key = jax.random.PRNGKey(0)
    k1, k2, k3, k4 = jax.random.split(key, 4)

    def reference(pred, true, gamma=1.5, alpha=0.25, reduction="mean"):
        p = pred.astype(jnp.float32)
        t = true.astype(jnp.float32)
        bce = jnp.maximum(p, 0.0) - p * t + jnp.log1p(jnp.exp(-jnp.abs(p)))
        prob = jax.nn.sigmoid(p)
        p_t = t * prob + (1.0 - t) * (1.0 - prob)
        alpha_factor = t * alpha + (1.0 - t) * (1.0 - alpha)
        modulating = (1.0 - p_t) ** gamma
        loss = bce * alpha_factor * modulating
        if reduction == "mean":
            return loss.mean()
        if reduction == "sum":
            return loss.sum()
        return loss

    # Case 1: lane-aligned NCHW logits / soft targets, default 'mean'.
    pred1 = jax.random.normal(k1, (2, 4, 16, 16), dtype=jnp.float32)
    true1 = jax.random.uniform(k2, (2, 4, 16, 16), dtype=jnp.float32)
    out1 = jax.block_until_ready(focal_loss(pred1, true1))
    ref1 = reference(pred1, true1)
    assert jnp.allclose(out1, ref1, rtol=1e-4, atol=1e-5), (out1, ref1)

    # Case 2: lane-unaligned shape -> exercises in-kernel tail masking, 'sum'.
    pred2 = jax.random.normal(k3, (2, 3, 7, 5), dtype=jnp.float32)
    true2 = (jax.random.uniform(k4, (2, 3, 7, 5)) > 0.5).astype(jnp.float32)
    out2 = jax.block_until_ready(focal_loss(pred2, true2, reduction="sum"))
    ref2 = reference(pred2, true2, reduction="sum")
    assert jnp.allclose(out2, ref2, rtol=1e-4, atol=1e-5), (out2, ref2)

    # Case 3: multiple row tiles + 2-way core split (small tm forces it).
    pred3 = jax.random.normal(k1, (2, 4, 32, 32), dtype=jnp.float32)
    true3 = jax.random.uniform(k2, (2, 4, 32, 32), dtype=jnp.float32)
    out3 = jax.block_until_ready(focal_loss(pred3, true3, tm=8))
    ref3 = reference(pred3, true3)
    assert jnp.allclose(out3, ref3, rtol=1e-4, atol=1e-5), (out3, ref3)

    # Case 4: reduction='none' elementwise path.
    out4 = jax.block_until_ready(focal_loss(pred1, true1, reduction="none"))
    ref4 = reference(pred1, true1, reduction="none")
    assert jnp.allclose(out4, ref4, rtol=1e-4, atol=1e-5)

    # Case 5: non-default gamma (square branch, no transcendental pow).
    out5 = jax.block_until_ready(
        focal_loss(pred1, true1, gamma=2.0, alpha=0.5, reduction="sum"))
    ref5 = reference(pred1, true1, gamma=2.0, alpha=0.5, reduction="sum")
    assert jnp.allclose(out5, ref5, rtol=1e-4, atol=1e-5), (out5, ref5)

    print("KERNEL_OK")
</pallas_src>

<mosaic_0001>
module attributes {stable_mosaic.version = 11 : i64} {
  func.func @_focal_sum_kernel(%arg0: i32, %arg1: i32, %arg2: memref<16x128xf32, #tpu.memory_space<vmem>>, %arg3: memref<16x128xf32, #tpu.memory_space<vmem>>, %arg4: memref<1x1xf32, #tpu.memory_space<vmem>>, %arg5: memref<8x128xf32, #tpu.memory_space<vmem>>) attributes {dimension_semantics = [#tpu.dimension_semantics<parallel>, #tpu.dimension_semantics<arbitrary>], iteration_bounds = array<i64: 1, 1>, scalar_prefetch = 0 : i64, scratch_operands = 1 : i64, tpu.core_type = #tpu.core_type<tc>, window_params = [{transform_indices = @transform_0, window_bounds = array<i64: 16, 128>}, {transform_indices = @transform_1, window_bounds = array<i64: 16, 128>}, {transform_indices = @transform_2, window_bounds = array<i64: 1, 1>}]} {
    %c0_i32 = arith.constant 0 : i32
    %0 = arith.cmpi eq, %arg1, %c0_i32 : i32
    %1 = arith.extui %0 : i1 to i32
    %c0_i32_0 = arith.constant 0 : i32
    %2 = arith.cmpi ne, %1, %c0_i32_0 : i32
    scf.if %2 {
      %cst_18 = arith.constant 0.000000e+00 : f32
      %51 = vector.broadcast %cst_18 : f32 to vector<8x128xf32>
      %c0_19 = arith.constant 0 : index
      %c0_20 = arith.constant 0 : index
      %52 = vector.load %arg5[%c0_19, %c0_20] : memref<8x128xf32, #tpu.memory_space<vmem>>, vector<8x128xf32>
      tpu.vector_store %arg5[%c0_19, %c0_20], %51 {strides = array<i32>} : memref<8x128xf32, #tpu.memory_space<vmem>>, vector<8x128xf32>,
    } else {
    }
    %c0 = arith.constant 0 : index
    %c0_1 = arith.constant 0 : index
    %3 = vector.load %arg2[%c0, %c0_1] : memref<16x128xf32, #tpu.memory_space<vmem>>, vector<16x128xf32>
    %c0_2 = arith.constant 0 : index
    %c0_3 = arith.constant 0 : index
    %4 = vector.load %arg3[%c0_2, %c0_3] : memref<16x128xf32, #tpu.memory_space<vmem>>, vector<16x128xf32>
    %5 = math.absf %3 : vector<16x128xf32>
    %cst = arith.constant 0.000000e+00 : f32
    %6 = vector.broadcast %cst : f32 to vector<16x128xf32>
    %7 = arith.subf %6, %5 : vector<16x128xf32>
    %8 = math.exp %7 : vector<16x128xf32>
    %cst_4 = arith.constant 1.000000e+00 : f32
    %9 = vector.broadcast %cst_4 : f32 to vector<16x128xf32>
    %10 = arith.addf %9, %8 : vector<16x128xf32>
    %11 = math.log %10 : vector<16x128xf32>
    %cst_5 = arith.constant 0.000000e+00 : f32
    %12 = vector.broadcast %cst_5 : f32 to vector<16x128xf32>
    %13 = arith.maximumf %3, %12 : vector<16x128xf32>
    %14 = arith.mulf %3, %4 : vector<16x128xf32>
    %15 = arith.subf %13, %14 : vector<16x128xf32>
    %16 = arith.addf %15, %11 : vector<16x128xf32>
    %cst_6 = arith.constant 1.000000e+00 : f32
    %17 = vector.broadcast %cst_6 : f32 to vector<16x128xf32>
    %18 = arith.addf %17, %8 : vector<16x128xf32>
    %cst_7 = arith.constant 1.000000e+00 : f32
    %19 = vector.broadcast %cst_7 : f32 to vector<16x128xf32>
    %20 = arith.divf %19, %18 : vector<16x128xf32>
    %cst_8 = arith.constant 0.000000e+00 : f32
    %21 = vector.broadcast %cst_8 : f32 to vector<16x128xf32>
    %22 = arith.cmpf oge, %3, %21 : vector<16x128xf32>
    %23 = arith.mulf %8, %20 : vector<16x128xf32>
    %24 = arith.select %22, %20, %23 : vector<16x128xi1>, vector<16x128xf32>
    %25 = arith.addf %4, %24 : vector<16x128xf32>
    %cst_9 = arith.constant 2.000000e+00 : f32
    %26 = vector.broadcast %cst_9 : f32 to vector<16x128xf32>
    %27 = arith.mulf %26, %4 : vector<16x128xf32>
    %28 = arith.mulf %27, %24 : vector<16x128xf32>
    %29 = arith.subf %25, %28 : vector<16x128xf32>
    %cst_10 = arith.constant -5.000000e-01 : f32
    %30 = vector.broadcast %cst_10 : f32 to vector<16x128xf32>
    %31 = arith.mulf %4, %30 : vector<16x128xf32>
    %cst_11 = arith.constant 7.500000e-01 : f32
    %32 = vector.broadcast %cst_11 : f32 to vector<16x128xf32>
    %33 = arith.addf %32, %31 : vector<16x128xf32>
    %34 = math.sqrt %29 : vector<16x128xf32>
    %35 = arith.mulf %29, %34 : vector<16x128xf32>
    %36 = arith.mulf %16, %33 : vector<16x128xf32>
    %37 = arith.mulf %36, %35 : vector<16x128xf32>
    %c1_i32 = arith.constant 1 : i32
    %38 = arith.muli %arg0, %c1_i32 : i32
    %39 = arith.addi %38, %arg1 : i32
    %c2048_i32 = arith.constant 2048 : i32
    %40 = arith.muli %39, %c2048_i32 : i32
    %c2048_i32_12 = arith.constant 2048 : i32
    %41 = arith.addi %40, %c2048_i32_12 : i32
    %c2048_i32_13 = arith.constant 2048 : i32
    %42 = arith.cmpi sgt, %41, %c2048_i32_13 : i32
    %true = arith.constant true
    %43 = arith.xori %42, %true : i1
    %44 = arith.extui %43 : i1 to i32
    %c0_i32_14 = arith.constant 0 : i32
    %45 = arith.cmpi ne, %44, %c0_i32_14 : i32
    scf.if %45 {
      %c0_18 = arith.constant 0 : index
      %c0_19 = arith.constant 0 : index
      %51 = vector.load %arg5[%c0_18, %c0_19] : memref<8x128xf32, #tpu.memory_space<vmem>>, vector<8x128xf32>
      %52 = vector.shape_cast %37 : vector<16x128xf32> to vector<2x8x128xf32>
      %cst_20 = arith.constant dense<0.000000e+00> : vector<8x128xf32>
      %53 = vector.multi_reduction <add>, %52, %cst_20 [0] : vector<2x8x128xf32> to vector<8x128xf32>
      %54 = arith.addf %51, %53 : vector<8x128xf32>
      %c0_21 = arith.constant 0 : index
      %c0_22 = arith.constant 0 : index
      %55 = vector.load %arg5[%c0_21, %c0_22] : memref<8x128xf32, #tpu.memory_space<vmem>>, vector<8x128xf32>
      tpu.vector_store %arg5[%c0_21, %c0_22], %54 {strides = array<i32>} : memref<8x128xf32, #tpu.memory_space<vmem>>, vector<8x128xf32>,
    } else {
    }
    %46 = arith.extui %42 : i1 to i32
    %c0_i32_15 = arith.constant 0 : i32
    %47 = arith.cmpi ne, %46, %c0_i32_15 : i32
    scf.if %47 {
      %51 = tpu.iota {dimensions = array<i32: 0>} : vector<16x128xi32>
      %c16_i32 = arith.constant 16 : i32
      %52 = arith.muli %39, %c16_i32 : i32
      %53 = vector.broadcast %52 : i32 to vector<16x128xi32>
      %54 = arith.addi %51, %53 : vector<16x128xi32>
      %55 = tpu.iota {dimensions = array<i32: 1>} : vector<16x128xi32>
      %c128_i32 = arith.constant 128 : i32
      %56 = vector.broadcast %c128_i32 : i32 to vector<16x128xi32>
      %57 = arith.muli %54, %56 : vector<16x128xi32>
      %58 = arith.addi %57, %55 : vector<16x128xi32>
      %c2048_i32_18 = arith.constant 2048 : i32
      %59 = vector.broadcast %c2048_i32_18 : i32 to vector<16x128xi32>
      %60 = arith.cmpi slt, %58, %59 : vector<16x128xi32>
      %cst_19 = arith.constant 0.000000e+00 : f32
      %61 = vector.broadcast %cst_19 : f32 to vector<16x128xf32>
      %62 = arith.select %60, %37, %61 : vector<16x128xi1>, vector<16x128xf32>
      %c0_20 = arith.constant 0 : index
      %c0_21 = arith.constant 0 : index
      %63 = vector.load %arg5[%c0_20, %c0_21] : memref<8x128xf32, #tpu.memory_space<vmem>>, vector<8x128xf32>
      %64 = vector.shape_cast %62 : vector<16x128xf32> to vector<2x8x128xf32>
      %cst_22 = arith.constant dense<0.000000e+00> : vector<8x128xf32>
      %65 = vector.multi_reduction <add>, %64, %cst_22 [0] : vector<2x8x128xf32> to vector<8x128xf32>
      %66 = arith.addf %63, %65 : vector<8x128xf32>
      %c0_23 = arith.constant 0 : index
      %c0_24 = arith.constant 0 : index
      %67 = vector.load %arg5[%c0_23, %c0_24] : memref<8x128xf32, #tpu.memory_space<vmem>>, vector<8x128xf32>
      tpu.vector_store %arg5[%c0_23, %c0_24], %66 {strides = array<i32>} : memref<8x128xf32, #tpu.memory_space<vmem>>, vector<8x128xf32>,
    } else {
    }
    %c0_i32_16 = arith.constant 0 : i32
    %48 = arith.cmpi eq, %arg1, %c0_i32_16 : i32
    %49 = arith.extui %48 : i1 to i32
    %c0_i32_17 = arith.constant 0 : i32
    %50 = arith.cmpi ne, %49, %c0_i32_17 : i32
    scf.if %50 {
      %c0_18 = arith.constant 0 : index
      %c0_19 = arith.constant 0 : index
      %51 = vector.load %arg5[%c0_18, %c0_19] : memref<8x128xf32, #tpu.memory_space<vmem>>, vector<8x128xf32>
      %52 = vector.shape_cast %51 : vector<8x128xf32> to vector<1x8x128xf32>
      %cst_20 = arith.constant dense<0.000000e+00> : vector<1xf32>
      %53 = vector.multi_reduction <add>, %52, %cst_20 [1, 2] : vector<1x8x128xf32> to vector<1xf32>
      %54 = vector.shape_cast %53 : vector<1xf32> to vector<1x1x1xf32>
      %55 = vector.extract %54[0, 0, 0] : f32 from vector<1x1x1xf32>
      %56 = vector.broadcast %55 : f32 to vector<1x1xf32>
      %c0_21 = arith.constant 0 : index
      %c0_22 = arith.constant 0 : index
      %57 = vector.load %arg4[%c0_21, %c0_22] : memref<1x1xf32, #tpu.memory_space<vmem>>, vector<1x1xf32>
      tpu.vector_store %arg4[%c0_21, %c0_22], %56 {strides = array<i32>} : memref<1x1xf32, #tpu.memory_space<vmem>>, vector<1x1xf32>,
    } else {
    }
    return
  }
  func.func @transform_0(%arg0: i32, %arg1: i32) -> (i32, i32) {
    %c1_i32 = arith.constant 1 : i32
    %0 = arith.muli %arg0, %c1_i32 : i32
    %1 = arith.addi %0, %arg1 : i32
    %c0_i32 = arith.constant 0 : i32
    %2 = arith.minsi %1, %c0_i32 : i32
    %c0_i32_0 = arith.constant 0 : i32
    %c0_i32_1 = arith.constant 0 : i32
    return %2, %c0_i32_0 : i32, i32
  }
  func.func @transform_1(%arg0: i32, %arg1: i32) -> (i32, i32) {
    %c1_i32 = arith.constant 1 : i32
    %0 = arith.muli %arg0, %c1_i32 : i32
    %1 = arith.addi %0, %arg1 : i32
    %c0_i32 = arith.constant 0 : i32
    %2 = arith.minsi %1, %c0_i32 : i32
    %c0_i32_0 = arith.constant 0 : i32
    %c0_i32_1 = arith.constant 0 : i32
    return %2, %c0_i32_0 : i32, i32
  }
  func.func @transform_2(%arg0: i32, %arg1: i32) -> (i32, i32) {
    %c0_i32 = arith.constant 0 : i32
    %c0_i32_0 = arith.constant 0 : i32
    return %arg0, %c0_i32 : i32, i32
  }
}

</mosaic_0001>

<llo_original>
// kernel: tpu_custom_call.1
$region0: #{tpu_custom_call.1}
  #allocation0 [shape = 'u32[]', space=smem, size = 0x4, offset = 0x4, fixed_abs, tag = 'smem constant byte address 0x4 - core index']
  #allocation1 [shape = 'u32[72,128]{1,0:T(1,128)}', space=vmem, size = 0x9000, scoped, tag = 'internal scratch']
  #allocation2 [shape = 'f32[8,128]{1,0:T(8,128)}', space=vmem, size = 0x1000, scoped, tag = 'scratch operand']
  %s0 = inlined_call_operand.hbm [shape: f32[16,128], index: 0, kind: input, shape index: {}]
  %s1 = inlined_call_operand.hbm [shape: f32[16,128], index: 1, kind: input, shape index: {}]
  %s2 = inlined_call_operand.hbm [shape: f32[1,1], index: 2, kind: output, shape index: {}]
  %s3 = sld [smem:[#allocation0]]
  $region42: #{tpu_custom_call.1} parent=0
    _
  %s5 = ssub.s32 1, %s3
  %s6 = scalar_select 0, %s5, %s3
  $region1: #{tpu_custom_call.1} parent=0
    #allocation3 [shape = 'u8[8192]{0}', space=vmem, size = 0x2000, scoped, tag = 'input window, operand 0, single buffered']
    #allocation4 [shape = 's32[1]{0}', space=sflag, size = 0x4, scoped, tag = 'scoped memory for tpu_custom_call.1']
    #allocation5 [shape = 's32[1]{0}', space=sflag, size = 0x4, scoped, tag = 'scoped memory for tpu_custom_call.1']
    #allocation6 [shape = 'u8[8192]{0}', space=vmem, size = 0x2000, scoped, tag = 'input window, operand 1, single buffered']
    #allocation7 [shape = 's32[1]{0}', space=sflag, size = 0x4, scoped, tag = 'scoped memory for tpu_custom_call.1']
    #allocation8 [shape = 'u8[512]{0}', space=vmem, size = 0x400, scoped, tag = 'output window, operand 0, single buffered']
    %7 = vsyncpa [#allocation4], 0
    %8 = vsyncpa [#allocation7], 0
    %9 = vsyncpa [#allocation5], 0
    // Predicated region
    $region2: #{tpu_custom_call.1} parent=1 // pred_check
      _
    $region3: #{tpu_custom_call.1} parent=1 // pred_check_branch
      %11 = sbr.rel (0) target = $region5
    $region4: #{tpu_custom_call.1} parent=1 // pred_region
      %s12 = sadd.s32 0, 0
      %p13 = scmp.lt.s32.totalorder %s12, 0
      %s14 = scalar_select %p13, %s12, 0
      %s15 = smul.u32 2, %s14
      %17 = vsyncadd [#allocation4], 0
      %s18 = smul.addr %s15, 8
      %s19 = scalar_lea.hbm %s0, %s18
      %s20 = sshll.u32 %s19, 4
      %s21 = int_to_ptr.hbm [resolvable:$true] %s20
      %s22 = sshll.u32 [#allocation3], 4
      %s23 = int_to_ptr.vmem [resolvable:$true] %s22
      %28 = dma.hbm_to_vmem [thread:$0]  %s21, 256, %s23, [#allocation4], 128, 128, 8
    $region5: #{tpu_custom_call.1} parent=1 // pred_fallthru
      _
    // Predicated region
    $region6: #{tpu_custom_call.1} parent=1 // pred_check
      _
    $region7: #{tpu_custom_call.1} parent=1 // pred_check_branch
      %30 = sbr.rel (0) target = $region9
    $region8: #{tpu_custom_call.1} parent=1 // pred_region
      %s31 = sadd.s32 0, 0
      %p32 = scmp.lt.s32.totalorder %s31, 0
      %s33 = scalar_select %p32, %s31, 0
      %s34 = smul.u32 2, %s33
      %36 = vsyncadd [#allocation7], 0
      %s37 = smul.addr %s34, 8
      %s38 = scalar_lea.hbm %s1, %s37
      %s39 = sshll.u32 %s38, 4
      %s40 = int_to_ptr.hbm [resolvable:$true] %s39
      %s41 = sshll.u32 [#allocation6], 4
      %s42 = int_to_ptr.vmem [resolvable:$true] %s41
      %47 = dma.hbm_to_vmem [thread:$0]  %s40, 256, %s42, [#allocation7], 128, 128, 8
    $region9: #{tpu_custom_call.1} parent=1 // pred_fallthru
      _
    // Predicated region
    $region10: #{tpu_custom_call.1} parent=1 // pred_check
      _
    $region11: #{tpu_custom_call.1} parent=1 // pred_check_branch
      %49 = sbr.rel (0) target = $region13
    $region12: #{tpu_custom_call.1} parent=1 // pred_region
      %51 = dma.done [#allocation4], 256
    $region13: #{tpu_custom_call.1} parent=1 // pred_fallthru
      _
    // Predicated region
    $region14: #{tpu_custom_call.1} parent=1 // pred_check
      _
    $region15: #{tpu_custom_call.1} parent=1 // pred_check_branch
      %53 = sbr.rel (0) target = $region17
    $region16: #{tpu_custom_call.1} parent=1 // pred_region
      %55 = dma.done [#allocation7], 256
    $region17: #{tpu_custom_call.1} parent=1 // pred_fallthru
      _
    %s56 = sadd.s32 0, 0
    %p57 = scmp.lt.s32.totalorder %s56, 0
    %s58 = scalar_select %p57, %s56, 0
    %s59 = smul.u32 2, %s58
    %s60 = sadd.s32 0, 0
    %p61 = scmp.lt.s32.totalorder %s60, 0
    %s62 = scalar_select %p61, %s60, 0
    %s63 = smul.u32 2, %s62
    %p64 = scmp.eq.s32.totalorder 0, 0
    // Predicated region
    $region18: #{tpu_custom_call.1} parent=1 // pred_check
      %p65 = pneg %p64
    $region19: #{tpu_custom_call.1} parent=1 // pred_check_branch
      %67 = sbr.rel (%p65) target = $region21
    $region20: #{tpu_custom_call.1} parent=1 // pred_region
      %68 = vst [vmem:[#allocation2] sm:$0xff] 0.0
    $region21: #{tpu_custom_call.1} parent=1 // pred_fallthru
      _
    %v69 = vld [vmem:[#allocation3] sm:$0xff]
    %v70 = vld [vmem:[#allocation3 + $0x8] sm:$0xff]
    %v71 = vld [vmem:[#allocation6] sm:$0xff]
    %v72 = vld [vmem:[#allocation6 + $0x8] sm:$0xff]
    %v73 = vand.u32 2147483647, %v69
    %v74 = vand.u32 2147483647, %v70
    %v75 = vsub.f32 0.0, %v73
    %v76 = vsub.f32 0.0, %v74
    %v77 = vmul.f32 %v75, 1.442695
    %v78 = vpow.pop %v77
    %v79 = vmul.f32 %v76, 1.442695
    %v80 = vpow.pop %v79
    %v81 = vadd.f32 %v78, 1.0
    %v82 = vadd.f32 %v80, 1.0
    %v83 = vlog2.pop %v81
    %v84 = vmul.f32 %v83, 0.6931472
    %v85 = vlog2.pop %v82
    %v86 = vmul.f32 %v85, 0.6931472
    %v87 = vmax.f32 %v69, 0.0
    %v88 = vmax.f32 %v70, 0.0
    %v89 = vmul.f32 %v69, %v71
    %v90 = vmul.f32 %v70, %v72
    %v91 = vsub.f32 %v87, %v89
    %v92 = vsub.f32 %v88, %v90
    %v93 = vadd.f32 %v91, %v84
    %v94 = vadd.f32 %v92, %v86
    %v95 = vrcp.pop %v81
    %v96 = vmul.f32 %v81, %v95
    %v97 = vsub.f32 1.0, %v96
    %v98 = vmul.f32 %v95, %v97
    %v99 = vadd.f32 %v95, %v98
    %vm100 = vweird.f32 %v81
    %vm101 = vweird.f32 %v95
    %vm102 = vmor %vm100, %vm101
    %v103 = vsel %vm102, %v95, %v99
    %v104 = vand.u32 2147483647, %v81
    %vm105 = vcmp.eq.f32.partialorder %v104, 8.507059e+37
    %v106 = vand.u32 %v81, 2147483648
    %v107 = vor.u32 1.1754944e-38, %v106
    %v108 = vsel %vm105, %v107, %v103
    %v109 = vmul.f32 1.0, %v108
    %v110 = vrcp.pop %v82
    %v111 = vmul.f32 %v82, %v110
    %v112 = vsub.f32 1.0, %v111
    %v113 = vmul.f32 %v110, %v112
    %v114 = vadd.f32 %v110, %v113
    %vm115 = vweird.f32 %v82
    %vm116 = vweird.f32 %v110
    %vm117 = vmor %vm115, %vm116
    %v118 = vsel %vm117, %v110, %v114
    %v119 = vand.u32 2147483647, %v82
    %vm120 = vcmp.eq.f32.partialorder %v119, 8.507059e+37
    %v121 = vand.u32 %v82, 2147483648
    %v122 = vor.u32 1.1754944e-38, %v121
    %v123 = vsel %vm120, %v122, %v118
    %v124 = vmul.f32 1.0, %v123
    %vm125 = vcmp.ge.f32.partialorder %v69, 0.0
    %vm126 = vcmp.ge.f32.partialorder %v70, 0.0
    %v127 = vmul.f32 %v78, %v109
    %v128 = vmul.f32 %v80, %v124
    %v129 = vsel %vm125, %v109, %v127
    %v130 = vsel %vm126, %v124, %v128
    %v131 = vadd.f32 %v71, %v129
    %v132 = vadd.f32 %v72, %v130
    %v133 = vmul.f32 %v71, 2.0
    %v134 = vmul.f32 %v72, 2.0
    %v135 = vmul.f32 %v133, %v129
    %v136 = vmul.f32 %v134, %v130
    %v137 = vsub.f32 %v131, %v135
    %v138 = vsub.f32 %v132, %v136
    %v139 = vmul.f32 %v71, -0.5
    %v140 = vmul.f32 %v72, -0.5
    %v141 = vadd.f32 %v139, 0.75
    %v142 = vadd.f32 %v140, 0.75
    %v143 = vrsqrt.pop %v137
    %v144 = vmul.f32 %v143, %v137
    %v145 = vmul.f32 %v144, %v143
    %v146 = vmul.f32 0.5, %v145
    %v147 = vsub.f32 1.5, %v146
    %v148 = vmul.f32 %v143, %v147
    %v149 = vmul.f32 %v137, %v148
    %vm150 = vcmp.eq.f32.partialorder %v137, inf
    %v151 = vsel %vm150, %v137, %v149
    %vm152 = vcmp.eq.f32.partialorder %v137, 0.0
    %v153 = vand.u32 %v137, 2147483648
    %v154 = vsel %vm152, %v153, %v151
    %v155 = vrsqrt.pop %v138
    %v156 = vmul.f32 %v155, %v138
    %v157 = vmul.f32 %v156, %v155
    %v158 = vmul.f32 0.5, %v157
    %v159 = vsub.f32 1.5, %v158
    %v160 = vmul.f32 %v155, %v159
    %v161 = vmul.f32 %v138, %v160
    %vm162 = vcmp.eq.f32.partialorder %v138, inf
    %v163 = vsel %vm162, %v138, %v161
    %vm164 = vcmp.eq.f32.partialorder %v138, 0.0
    %v165 = vand.u32 %v138, 2147483648
    %v166 = vsel %vm164, %v165, %v163
    %v167 = vmul.f32 %v137, %v154
    %v168 = vmul.f32 %v138, %v166
    %v169 = vmul.f32 %v93, %v141
    %v170 = vmul.f32 %v94, %v142
    %v171 = vmul.f32 %v169, %v167
    %v172 = vmul.f32 %v170, %v168
    %s173 = sadd.s32 0, 0
    %s174 = smul.u32 %s173, 2048
    %s175 = sadd.s32 %s174, 2048
    %p176 = scmp.gt.s32.totalorder %s175, 2048
    %p177 = scmp.le.s32.totalorder %s175, 2048
    // Predicated region
    $region22: #{tpu_custom_call.1} parent=1 // pred_check
      %p178 = pneg %p177
    $region23: #{tpu_custom_call.1} parent=1 // pred_check_branch
      %180 = sbr.rel (%p178) target = $region25
    $region24: #{tpu_custom_call.1} parent=1 // pred_region
      %v181 = vld [vmem:[#allocation2] sm:$0xff]
      %v182 = vadd.f32 %v171, %v172
      %v183 = vadd.f32 %v181, %v182
      %184 = vst [vmem:[#allocation2] sm:$0xff] %v183
    $region25: #{tpu_custom_call.1} parent=1 // pred_fallthru
      _
    // Predicated region
    $region26: #{tpu_custom_call.1} parent=1 // pred_check
      %p185 = pneg %p176
    $region27: #{tpu_custom_call.1} parent=1 // pred_check_branch
      %187 = sbr.rel (%p185) target = $region29
    $region28: #{tpu_custom_call.1} parent=1 // pred_region
      %v188 = vlaneseq
      %v189 = vshrl.u32 %v188, 7
      %v190 = vadd.s32 %v189, 8
      %s191 = smul.u32 %s173, 16
      %v192 = vstv %s191
      %v193 = vadd.s32 %v189, %v192
      %v194 = vadd.s32 %v190, %v192
      %v195 = vlaneseq
      %v196 = vand.u32 %v195, 127
      %v197 = vmul.u32 %v193, 128
      %v198 = vmul.u32 %v194, 128
      %v199 = vadd.s32 %v197, %v196
      %v200 = vadd.s32 %v198, %v196
      %vm201 = vcmp.lt.s32.totalorder %v199, 2048
      %vm202 = vcmp.lt.s32.totalorder %v200, 2048
      %v203 = vsel %vm201, %v171, 0.0
      %v204 = vsel %vm202, %v172, 0.0
      %v205 = vld [vmem:[#allocation2] sm:$0xff]
      %v206 = vadd.f32 %v203, %v204
      %v207 = vadd.f32 %v205, %v206
      %208 = vst [vmem:[#allocation2] sm:$0xff] %v207
    $region29: #{tpu_custom_call.1} parent=1 // pred_fallthru
      _
    // Predicated region
    $region30: #{tpu_custom_call.1} parent=1 // pred_check
      %p209 = pneg %p64
    $region31: #{tpu_custom_call.1} parent=1 // pred_check_branch
      %211 = sbr.rel (%p209) target = $region33
    $region32: #{tpu_custom_call.1} parent=1 // pred_region
      %v212 = vld [vmem:[#allocation2] sm:$0xff]
      %213 = vadd.xlane.f32.xlu0 %v212
      %v214 = vpop.xlane.xlu0 %213
      %v215 = vrot.slane %v214, 4
      %v216 = vadd.f32 %v214, %v215
      %v217 = vrot.slane %v216, 2
      %v218 = vadd.f32 %v216, %v217
      %v219 = vrot.slane %v218, 1
      %v220 = vadd.f32 %v218, %v219
      %s221 = vtos %v220
      %v222 = vstv %s221
      %vm223 = vcmask 0
      %224 = vst.msk [vmem:[#allocation8] sm:$0x1] %vm223, %v222
    $region33: #{tpu_custom_call.1} parent=1 // pred_fallthru
      _
    // Predicated region
    $region34: #{tpu_custom_call.1} parent=1 // pred_check
      _
    $region35: #{tpu_custom_call.1} parent=1 // pred_check_branch
      %226 = sbr.rel (0) target = $region37
    $region36: #{tpu_custom_call.1} parent=1 // pred_region
      %228 = vsyncadd [#allocation5], 0
      %s230 = sshll.u32 [#allocation8], 4
      %s231 = int_to_ptr.vmem [resolvable:$true] %s230
      %s232 = sshll.u32 %s2, 4
      %s233 = int_to_ptr.hbm [resolvable:$true] %s232
      %235 = dma.vmem_to_hbm [thread:$0]  %s231, 16, %s233, [#allocation5]
    $region37: #{tpu_custom_call.1} parent=1 // pred_fallthru
      _
    // Predicated region
    $region38: #{tpu_custom_call.1} parent=1 // pred_check
      _
    $region39: #{tpu_custom_call.1} parent=1 // pred_check_branch
      %237 = sbr.rel (0) target = $region41
    $region40: #{tpu_custom_call.1} parent=1 // pred_region
      %239 = dma.done [#allocation5], 16
    $region41: #{tpu_custom_call.1} parent=1 // pred_fallthru
      _
    %240 = vsyncpa [#allocation4], 1
    %241 = vsyncpa [#allocation7], 1
    %242 = vsyncpa [#allocation5], 1

</llo_original>
